<compile_context>
chip_gen: v7x
topology: tpu7x:2x2x1
jax: 0.10.0
libtpu: 0.0.40
codegen_flags: <defaults>
</compile_context>

<pallas_src>
import math

import jax
import jax.numpy as jnp
from jax.experimental import pallas as pl
from jax.experimental.pallas import tpu as pltpu

FREQ = 256           # frequency_embedding_size
HIDDEN = 128         # hidden_size
MAX_PERIOD = 10000.0


# ---------------------------------------------------------------------------
# Kernel
# ---------------------------------------------------------------------------
def _make_kernel(split_k: bool):
    """split_k=True -> two K=128 matmuls (v4/v5); False -> one K=256 (v6e/v7x)."""

    def kernel(t_ref, freqs_ref, w1_ref, b1_ref, w2_ref, b2_ref, o_ref):
        # t_ref: (M, 1) f32, freqs_ref: (1, half) f32
        args = t_ref[...] * freqs_ref[...]                 # (M, half) f32
        cos_e = jnp.cos(args)                              # f32 elementwise
        sin_e = jnp.sin(args)

        if split_k:
            # Two native-depth K=128 matmuls for the 128-deep MXU (v4/v5).
            w1 = w1_ref[...]                               # (2*half, H) bf16
            half = w1.shape[0] // 2
            h = (jnp.dot(cos_e.astype(jnp.bfloat16), w1[:half],
                         preferred_element_type=jnp.float32)
                 + jnp.dot(sin_e.astype(jnp.bfloat16), w1[half:],
                           preferred_element_type=jnp.float32))
        else:
            # Lane-aligned concat (128 | 128) -> single K=256 matmul that fills
            # the 256-deep MXU in one push (v6e MRF / v7x MRB accumulate).
            emb = jnp.concatenate([cos_e, sin_e], axis=-1).astype(jnp.bfloat16)
            h = jnp.dot(emb, w1_ref[...], preferred_element_type=jnp.float32)

        h = h + b1_ref[...]                                # (M, H) f32

        # SiLU in f32; exp + reciprocal both ride the EUP slot.
        h = h * pl.reciprocal(1.0 + jnp.exp(-h), approx=True)

        out = jnp.dot(h.astype(jnp.bfloat16), w2_ref[...],
                      preferred_element_type=jnp.float32) + b2_ref[...]
        o_ref[...] = out.astype(o_ref.dtype)

    return kernel


# ---------------------------------------------------------------------------
# One-time parameter preparation (hoisted out of the per-step call)
# ---------------------------------------------------------------------------
def prepare_timestep_embedder_params(w1, b1, w2, b2, *, max_period=MAX_PERIOD):
    """w1: (FREQ, H) f32, b1: (H,), w2: (H, H), b2: (H,) -> prepped dict."""
    freq, H = w1.shape
    half = freq // 2
    freqs = jnp.exp(
        -math.log(max_period) * jnp.arange(half, dtype=jnp.float32) / half
    ).reshape(1, half)
    return {
        "freqs": freqs,                                    # (1, half) f32
        "w1": w1.astype(jnp.bfloat16),                     # (freq, H)  bf16
        "b1": b1.reshape(1, H).astype(jnp.float32),        # (1, H)     f32
        "w2": w2.astype(jnp.bfloat16),                     # (H, H)     bf16
        "b2": b2.reshape(1, H).astype(jnp.float32),        # (1, H)     f32
    }


def _use_split_k() -> bool:
    """True on chips with a 128-deep MXU (v2/v3/v4/v5); False on v6e/v7x."""
    try:
        kind = getattr(jax.devices()[0], "device_kind", "").lower()
    except Exception:
        kind = ""
    return any(tag in kind for tag in ("v2", "v3", "v4", "v5"))


# ---------------------------------------------------------------------------
# Wrapper
# ---------------------------------------------------------------------------
def timestep_embedder(t, params, *, out_dtype=jnp.float32, block_m=256):
    """t: (B,) timesteps; params from prepare_timestep_embedder_params -> (B, H)."""
    freqs, w1, b1, w2, b2 = (params["freqs"], params["w1"], params["b1"],
                             params["w2"], params["b2"])
    B = t.shape[0]
    freq, H = w1.shape
    half = freq // 2
    t2 = t.reshape(B, 1).astype(jnp.float32)

    kernel = _make_kernel(_use_split_k())

    out_bytes = B * H * jnp.dtype(out_dtype).itemsize
    cost = pl.CostEstimate(
        flops=2 * B * (freq * H + H * H),
        transcendentals=B * (freq + 2 * H),                 # cos/sin + exp/rcp
        bytes_accessed=int(2 * (w1.size + w2.size)          # bf16 weights
                           + 4 * (b1.size + b2.size + freqs.size + t2.size)
                           + out_bytes),
    )
    out_shape = jax.ShapeDtypeStruct((B, H), out_dtype)
    vmem = pltpu.MemorySpace.VMEM

    # Batched path: 1-D grid over M-tiles; "parallel" lets v7x's two
    # TensorCores each take half the batch (harmless elsewhere).
    if B >= 2 * block_m and B % block_m == 0:
        return pl.pallas_call(
            kernel,
            out_shape=out_shape,
            grid=(B // block_m,),
            in_specs=[
                pl.BlockSpec((block_m, 1), lambda i: (i, 0)),
                pl.BlockSpec((1, half),    lambda i: (0, 0)),
                pl.BlockSpec((freq, H),    lambda i: (0, 0)),
                pl.BlockSpec((1, H),       lambda i: (0, 0)),
                pl.BlockSpec((H, H),       lambda i: (0, 0)),
                pl.BlockSpec((1, H),       lambda i: (0, 0)),
            ],
            out_specs=pl.BlockSpec((block_m, H), lambda i: (i, 0)),
            compiler_params=pltpu.CompilerParams(
                dimension_semantics=("parallel",)),
            cost_estimate=cost,
        )(t2, freqs, w1, b1, w2, b2)

    # Small-B path: gridless, whole problem as single full-array VMEM blocks
    # (~0.2 MiB total footprint; no per-step pipeline bookkeeping).
    full = pl.BlockSpec(memory_space=vmem)
    return pl.pallas_call(
        kernel,
        out_shape=out_shape,
        in_specs=[full] * 6,
        out_specs=full,
        cost_estimate=cost,
    )(t2, freqs, w1, b1, w2, b2)


# ---------------------------------------------------------------------------
# Pure-JAX f32 reference mirroring the PyTorch module
# ---------------------------------------------------------------------------
def timestep_embedder_ref(t, w1, b1, w2, b2):
    half = FREQ // 2
    freqs = jnp.exp(-math.log(MAX_PERIOD)
                    * jnp.arange(half, dtype=jnp.float32) / half)
    args = t[:, None].astype(jnp.float32) * freqs[None]
    emb = jnp.concatenate([jnp.cos(args), jnp.sin(args)], axis=-1)
    h = emb @ w1 + b1
    h = h * jax.nn.sigmoid(h)
    return h @ w2 + b2


if __name__ == "__main__":
    key = jax.random.PRNGKey(0)
    k_t, k_w1, k_b1, k_w2, k_b2, k_tb = jax.random.split(key, 6)

    B = 8
    t = jax.random.uniform(k_t, (B,), dtype=jnp.float32, minval=0.0,
                           maxval=1000.0)

    w1 = 0.02 * jax.random.normal(k_w1, (FREQ, HIDDEN), dtype=jnp.float32)
    b1 = 0.02 * jax.random.normal(k_b1, (HIDDEN,), dtype=jnp.float32)
    w2 = 0.02 * jax.random.normal(k_w2, (HIDDEN, HIDDEN), dtype=jnp.float32)
    b2 = 0.02 * jax.random.normal(k_b2, (HIDDEN,), dtype=jnp.float32)

    # One-time param prep (would live in model init, not the step loop).
    params = prepare_timestep_embedder_params(w1, b1, w2, b2)

    # Small-B gridless path.
    out = jax.block_until_ready(timestep_embedder(t, params))
    ref = timestep_embedder_ref(t, w1, b1, w2, b2)
    assert out.shape == (B, HIDDEN)
    assert jnp.allclose(out, ref, atol=1e-2, rtol=1e-2), \
        "small-batch mismatch vs. JAX reference"

    # Batched (gridded, "parallel") path with bf16 writeback.
    Bb = 512
    tb = jax.random.uniform(k_tb, (Bb,), dtype=jnp.float32, minval=0.0,
                            maxval=1000.0)
    outb = jax.block_until_ready(
        timestep_embedder(tb, params, out_dtype=jnp.bfloat16))
    refb = timestep_embedder_ref(tb, w1, b1, w2, b2)
    assert outb.shape == (Bb, HIDDEN)
    assert jnp.allclose(outb.astype(jnp.float32), refb, atol=3e-2, rtol=3e-2), \
        "batched mismatch vs. JAX reference"

    print("KERNEL_OK")
</pallas_src>

<mosaic_0001>
module attributes {stable_mosaic.version = 11 : i64} {
  func.func @kernel(%arg0: memref<8x1xf32, #tpu.memory_space<vmem>>, %arg1: memref<1x128xf32, #tpu.memory_space<vmem>>, %arg2: memref<256x128xbf16, #tpu.memory_space<vmem>>, %arg3: memref<1x128xf32, #tpu.memory_space<vmem>>, %arg4: memref<128x128xbf16, #tpu.memory_space<vmem>>, %arg5: memref<1x128xf32, #tpu.memory_space<vmem>>, %arg6: memref<8x128xf32, #tpu.memory_space<vmem>>) attributes {dimension_semantics = [], scalar_prefetch = 0 : i64, scratch_operands = 0 : i64, tpu.core_type = #tpu.core_type<tc>} {
    %c0 = arith.constant 0 : index
    %c0_0 = arith.constant 0 : index
    %0 = vector.load %arg0[%c0, %c0_0] : memref<8x1xf32, #tpu.memory_space<vmem>>, vector<8x1xf32>
    %c0_1 = arith.constant 0 : index
    %c0_2 = arith.constant 0 : index
    %1 = vector.load %arg1[%c0_1, %c0_2] : memref<1x128xf32, #tpu.memory_space<vmem>>, vector<1x128xf32>
    %2 = vector.broadcast %0 : vector<8x1xf32> to vector<8x128xf32>
    %3 = vector.broadcast %1 : vector<1x128xf32> to vector<8x128xf32>
    %4 = arith.mulf %2, %3 : vector<8x128xf32>
    %5 = math.cos %4 : vector<8x128xf32>
    %6 = math.sin %4 : vector<8x128xf32>
    %7 = tpu.concatenate %5, %6 in 1 : vector<8x128xf32>, vector<8x128xf32> -> vector<8x256xf32>
    %8 = arith.truncf %7 : vector<8x256xf32> to vector<8x256xbf16>
    %c0_3 = arith.constant 0 : index
    %c0_4 = arith.constant 0 : index
    %9 = vector.load %arg2[%c0_3, %c0_4] : memref<256x128xbf16, #tpu.memory_space<vmem>>, vector<256x128xbf16>
    %cst = arith.constant dense<0.000000e+00> : vector<8x128xf32>
    %10 = tpu.matmul %8, %9, %cst {dimension_numbers = #tpu.dot_dimension_numbers<[1], [0], [0], [1], [0, 0, 1, 1], [], []>} : vector<8x256xbf16>, vector<256x128xbf16>, vector<8x128xf32> -> vector<8x128xf32>
    %c0_5 = arith.constant 0 : index
    %c0_6 = arith.constant 0 : index
    %11 = vector.load %arg3[%c0_5, %c0_6] : memref<1x128xf32, #tpu.memory_space<vmem>>, vector<1x128xf32>
    %12 = vector.broadcast %11 : vector<1x128xf32> to vector<8x128xf32>
    %13 = arith.addf %10, %12 : vector<8x128xf32>
    %cst_7 = arith.constant 0.000000e+00 : f32
    %14 = vector.broadcast %cst_7 : f32 to vector<8x128xf32>
    %15 = arith.subf %14, %13 : vector<8x128xf32>
    %16 = math.exp %15 : vector<8x128xf32>
    %cst_8 = arith.constant 1.000000e+00 : f32
    %17 = vector.broadcast %cst_8 : f32 to vector<8x128xf32>
    %18 = arith.addf %17, %16 : vector<8x128xf32>
    %19 = tpu.reciprocal %18 {approx = true} : vector<8x128xf32> -> vector<8x128xf32>
    %20 = arith.mulf %13, %19 : vector<8x128xf32>
    %21 = arith.truncf %20 : vector<8x128xf32> to vector<8x128xbf16>
    %c0_9 = arith.constant 0 : index
    %c0_10 = arith.constant 0 : index
    %22 = vector.load %arg4[%c0_9, %c0_10] : memref<128x128xbf16, #tpu.memory_space<vmem>>, vector<128x128xbf16>
    %cst_11 = arith.constant dense<0.000000e+00> : vector<8x128xf32>
    %23 = tpu.matmul %21, %22, %cst_11 {dimension_numbers = #tpu.dot_dimension_numbers<[1], [0], [0], [1], [0, 0, 1, 1], [], []>} : vector<8x128xbf16>, vector<128x128xbf16>, vector<8x128xf32> -> vector<8x128xf32>
    %c0_12 = arith.constant 0 : index
    %c0_13 = arith.constant 0 : index
    %24 = vector.load %arg5[%c0_12, %c0_13] : memref<1x128xf32, #tpu.memory_space<vmem>>, vector<1x128xf32>
    %25 = vector.broadcast %24 : vector<1x128xf32> to vector<8x128xf32>
    %26 = arith.addf %23, %25 : vector<8x128xf32>
    %c0_14 = arith.constant 0 : index
    %c0_15 = arith.constant 0 : index
    %27 = vector.load %arg6[%c0_14, %c0_15] : memref<8x128xf32, #tpu.memory_space<vmem>>, vector<8x128xf32>
    tpu.vector_store %arg6[%c0_14, %c0_15], %26 {strides = array<i32>} : memref<8x128xf32, #tpu.memory_space<vmem>>, vector<8x128xf32>,
    return
  }
}

</mosaic_0001>

<llo_original>
// kernel: tpu_custom_call.1
$region0: #{tpu_custom_call.1}
  #allocation0 [shape = 'u32[]', space=smem, size = 0x4, offset = 0x4, fixed_abs, tag = 'smem constant byte address 0x4 - core index']
  #allocation1 [shape = 'u32[144,128]{1,0:T(1,128)}', space=vmem, size = 0x12000, scoped, tag = 'internal scratch']
  %s0 = inlined_call_operand.vmem [shape: f32[8,1], index: 0, kind: input, shape index: {}]
  %s1 = inlined_call_operand.vmem [shape: f32[1,128], index: 1, kind: input, shape index: {}]
  %s2 = inlined_call_operand.hbm [shape: bf16[256,128], index: 2, kind: input, shape index: {}]
  %s3 = inlined_call_operand.vmem [shape: f32[1,128], index: 3, kind: input, shape index: {}]
  %s4 = inlined_call_operand.hbm [shape: bf16[128,128], index: 4, kind: input, shape index: {}]
  %s5 = inlined_call_operand.vmem [shape: f32[1,128], index: 5, kind: input, shape index: {}]
  %s6 = inlined_call_operand.hbm [shape: f32[8,128], index: 6, kind: output, shape index: {}]
  %s7 = sld [smem:[#allocation0]]
  $region42: #{tpu_custom_call.1} parent=0
    _
  %s9 = ssub.s32 1, %s7
  %s10 = scalar_select 0, %s9, %s7
  $region1: #{tpu_custom_call.1} parent=0
    #allocation2 [shape = 'u8[65536]{0}', space=vmem, size = 0x10000, scoped, tag = 'input window, operand 2, single buffered']
    #allocation3 [shape = 's32[1]{0}', space=sflag, size = 0x4, scoped, tag = 'scoped memory for tpu_custom_call.1']
    #allocation4 [shape = 's32[1]{0}', space=sflag, size = 0x4, scoped, tag = 'scoped memory for tpu_custom_call.1']
    #allocation5 [shape = 'u8[32768]{0}', space=vmem, size = 0x8000, scoped, tag = 'input window, operand 4, single buffered']
    #allocation6 [shape = 's32[1]{0}', space=sflag, size = 0x4, scoped, tag = 'scoped memory for tpu_custom_call.1']
    #allocation7 [shape = 'u8[4096]{0}', space=vmem, size = 0x1000, scoped, tag = 'output window, operand 0, single buffered']
    %11 = vsyncpa [#allocation3], 0
    %12 = vsyncpa [#allocation6], 0
    %13 = vsyncpa [#allocation4], 0
    // Predicated region
    $region2: #{tpu_custom_call.1} parent=1 // pred_check
      _
    $region3: #{tpu_custom_call.1} parent=1 // pred_check_branch
      %15 = sbr.rel (0) target = $region5
    $region4: #{tpu_custom_call.1} parent=1 // pred_region
      _
    $region5: #{tpu_custom_call.1} parent=1 // pred_fallthru
      _
    // Predicated region
    $region6: #{tpu_custom_call.1} parent=1 // pred_check
      _
    $region7: #{tpu_custom_call.1} parent=1 // pred_check_branch
      %17 = sbr.rel (0) target = $region9
    $region8: #{tpu_custom_call.1} parent=1 // pred_region
      _
    $region9: #{tpu_custom_call.1} parent=1 // pred_fallthru
      _
    // Predicated region
    $region10: #{tpu_custom_call.1} parent=1 // pred_check
      _
    $region11: #{tpu_custom_call.1} parent=1 // pred_check_branch
      %19 = sbr.rel (0) target = $region13
    $region12: #{tpu_custom_call.1} parent=1 // pred_region
      %s21 = ssub.s32 2048, 2048
      %22 = vsyncadd [#allocation3], %s21
      %s23 = sshll.u32 [#allocation2], 4
      %s24 = int_to_ptr.vmem [resolvable:$true] %s23
      %29 = dma.hbm_to_vmem [thread:$0]  %s2, 2048, %s24, [#allocation3], 64, 64, 4
    $region13: #{tpu_custom_call.1} parent=1 // pred_fallthru
      _
    // Predicated region
    $region14: #{tpu_custom_call.1} parent=1 // pred_check
      _
    $region15: #{tpu_custom_call.1} parent=1 // pred_check_branch
      %31 = sbr.rel (0) target = $region17
    $region16: #{tpu_custom_call.1} parent=1 // pred_region
      _
    $region17: #{tpu_custom_call.1} parent=1 // pred_fallthru
      _
    // Predicated region
    $region18: #{tpu_custom_call.1} parent=1 // pred_check
      _
    $region19: #{tpu_custom_call.1} parent=1 // pred_check_branch
      %33 = sbr.rel (0) target = $region21
    $region20: #{tpu_custom_call.1} parent=1 // pred_region
      %s35 = ssub.s32 1024, 1024
      %36 = vsyncadd [#allocation6], %s35
      %s37 = sshll.u32 [#allocation5], 4
      %s38 = int_to_ptr.vmem [resolvable:$true] %s37
      %43 = dma.hbm_to_vmem [thread:$0]  %s4, 1024, %s38, [#allocation6], 64, 64, 4
    $region21: #{tpu_custom_call.1} parent=1 // pred_fallthru
      _
    // Predicated region
    $region22: #{tpu_custom_call.1} parent=1 // pred_check
      _
    $region23: #{tpu_custom_call.1} parent=1 // pred_check_branch
      %45 = sbr.rel (0) target = $region25
    $region24: #{tpu_custom_call.1} parent=1 // pred_region
      _
    $region25: #{tpu_custom_call.1} parent=1 // pred_fallthru
      _
    // Predicated region
    $region26: #{tpu_custom_call.1} parent=1 // pred_check
      _
    $region27: #{tpu_custom_call.1} parent=1 // pred_check_branch
      %47 = sbr.rel (0) target = $region29
    $region28: #{tpu_custom_call.1} parent=1 // pred_region
      %48 = dma.done [#allocation3], 2048
    $region29: #{tpu_custom_call.1} parent=1 // pred_fallthru
      _
    // Predicated region
    $region30: #{tpu_custom_call.1} parent=1 // pred_check
      _
    $region31: #{tpu_custom_call.1} parent=1 // pred_check_branch
      %50 = sbr.rel (0) target = $region33
    $region32: #{tpu_custom_call.1} parent=1 // pred_region
      %51 = dma.done [#allocation6], 1024
    $region33: #{tpu_custom_call.1} parent=1 // pred_fallthru
      _
    %v53 = vld [vmem:[%s0] sm:$0xff]
    %v54 = vld [vmem:[%s1] sm:$0x1]
    %56 = vset.pattern.permute.xlu0 0
    %57 = vperm.xlu0 %56, %v53
    %v58 = vpop.permute.xlu0 %57
    %v61 = vlaneseq
    %v62 = vshrl.u32 %v61, 7
    %v63 = vsub.s32 0, %v62
    %v64 = vrot.slane %v54, %v63
    %v66 = vmul.f32 %v58, %v64
    %v67 = vand.u32 2147483647, %v66
    %vm68 = vcmp.le.f32.partialorder %v67, 0.7853982
    %vm69 = vcmp.lt.s32.totalorder %v66, 0
    %v70 = vand.u32 %v66, 2139095040
    %v71 = vshrl.u32 %v70, 23
    %v72 = vsub.s32 %v71, 127
    %v73 = vand.u32 2147483647, %v66
    %v74 = vand.u32 %v73, 8388607
    %v75 = vor.u32 %v74, 8388608
    %v76 = vsub.s32 0, %v75
    %v77 = vadd.s32 %v72, 1
    %vm78 = vcmp.gt.s32.totalorder %v77, 0
    %v79 = vsel %vm78, %v77, 0
    %v80 = vshrl.u32 %v79, 5
    %v81 = vand.u32 %v79, 31
    %v82 = vsub.s32 32, %v81
    %v83 = vshrl.u32 683565275, %v82
    %v84 = vshll.u32 683565275, %v81
    %v85 = vshrl.u32 2475754826, %v82
    %v86 = vor.u32 %v84, %v85
    %v87 = vshll.u32 2475754826, %v81
    %v88 = vshrl.u32 2131351028, %v82
    %v89 = vor.u32 %v87, %v88
    %v90 = vshll.u32 2131351028, %v81
    %v91 = vshrl.u32 2102212464, %v82
    %v92 = vor.u32 %v90, %v91
    %v93 = vshll.u32 2102212464, %v81
    %v94 = vshrl.u32 920167782, %v82
    %v95 = vor.u32 %v93, %v94
    %v96 = vshll.u32 920167782, %v81
    %v97 = vshrl.u32 1326507024, %v82
    %v98 = vor.u32 %v96, %v97
    %vm99 = vcmp.lt.s32.totalorder %v80, 1
    %vm100 = vcmp.lt.s32.totalorder %v80, 2
    %vm101 = vcmp.lt.s32.totalorder %v80, 3
    %vm102 = vcmp.lt.s32.totalorder %v80, 4
    %v103 = vsel %vm99, %v83, %v86
    %v104 = vsel %vm102, %v92, 2102212464
    %v105 = vsel %vm101, %v89, %v104
    %v106 = vsel %vm100, %v103, %v105
    %v107 = vsel %vm99, %v86, %v89
    %v108 = vsel %vm102, %v95, 920167782
    %v109 = vsel %vm101, %v92, %v108
    %v110 = vsel %vm100, %v107, %v109
    %v111 = vsel %vm99, %v89, %v92
    %v112 = vsel %vm102, %v98, 1326507024
    %v113 = vsel %vm101, %v95, %v112
    %v114 = vsel %vm100, %v111, %v113
    %v115 = vshll.u32 %v75, 8
    %v116 = vmul.u32.u64.compose %v115, %v114
    %v117 = vextract.low.u32 %v116
    %v118 = vextract.high.u32 %v116
    %v119 = vmul.u32.u64.compose %v115, %v110
    %v120 = vextract.low.u32 %v119
    %v121 = vextract.high.u32 %v119
    %v122 = vmul.u32 %v115, %v106
    %v123 = vadd.s32 %v118, %v120
    %vm124 = vc.u32 %v118, %v120
    %v125 = vadd.s32 %v121, 1
    %v126 = vsel %vm124, %v125, %v121
    %v127 = vadd.s32 %v122, %v126
    %v128 = vadd.s32 %v127, 536870912
    %v129 = vshrl.u32 %v128, 30
    %v130 = vshll.u32 %v129, 30
    %v131 = vsub.s32 %v127, %v130
    %vm132 = vcmp.lt.s32.totalorder %v131, 0
    %v133 = vsub.s32 0, %v131
    %v134 = vsel %vm132, %v133, %v131
    %v135 = vclz %v134
    %v136 = vsub.s32 %v135, 2
    %vm137 = vcmp.gt.s32.totalorder 0, %v136
    %v138 = vsel %vm137, 0, %v136
    %v139 = vsub.s32 32, %v138
    %v140 = vshll.u32 %v131, %v138
    %v141 = vshrl.u32 %v123, %v139
    %v142 = vor.u32 %v140, %v141
    %v143 = vsub.s32 4294967266, %v138
    %v144 = vadd.s32 %v143, 127
    %v145 = vshll.u32 %v144, 23
    %v146 = vor.u32 4788187, %v145
    %v147 = vand.u32 2147483647, %v146
    %v149 = vcvt.s32.f32 %v142
    %v150 = vmul.f32 %v149, %v147
    %v151 = vxor.u32 %v150, 2147483648
    %v152 = vsel %vm69, %v151, %v150
    %v153 = vsub.s32 4, %v129
    %v154 = vsel %vm69, %v153, %v129
    %v155 = vsel %vm68, %v66, %v152
    %v156 = vsel %vm68, 0, %v154
    %v157 = vcosq.f32.pop %v155
    %v158 = vsinq.f32.pop %v155
    %vm159 = vweird.f32 %v66
    %v160 = vand.u32 %v156, 3
    %vm161 = vcmp.lt.s32.totalorder %v160, 2
    %vm162 = vcmp.eq.s32.totalorder %v160, 0
    %v163 = vxor.u32 %v158, 2147483648
    %v164 = vsel %vm162, %v157, %v163
    %vm165 = vcmp.eq.s32.totalorder %v160, 2
    %v166 = vxor.u32 %v157, 2147483648
    %v167 = vsel %vm165, %v166, %v158
    %v168 = vsel %vm161, %v164, %v167
    %v169 = vsel %vm159, nan, %v168
    %v170 = vand.u32 2147483647, %v66
    %vm171 = vcmp.le.f32.partialorder %v170, 0.7853982
    %vm172 = vcmp.lt.s32.totalorder %v66, 0
    %v173 = vand.u32 %v66, 2139095040
    %v174 = vshrl.u32 %v173, 23
    %v175 = vsub.s32 %v174, 127
    %v176 = vand.u32 2147483647, %v66
    %v177 = vand.u32 %v176, 8388607
    %v178 = vor.u32 %v177, 8388608
    %v179 = vsub.s32 0, %v178
    %v180 = vadd.s32 %v175, 1
    %vm181 = vcmp.gt.s32.totalorder %v180, 0
    %v182 = vsel %vm181, %v180, 0
    %v183 = vshrl.u32 %v182, 5
    %v184 = vand.u32 %v182, 31
    %v185 = vsub.s32 32, %v184
    %v186 = vshrl.u32 683565275, %v185
    %v187 = vshll.u32 683565275, %v184
    %v188 = vshrl.u32 2475754826, %v185
    %v189 = vor.u32 %v187, %v188
    %v190 = vshll.u32 2475754826, %v184
    %v191 = vshrl.u32 2131351028, %v185
    %v192 = vor.u32 %v190, %v191
    %v193 = vshll.u32 2131351028, %v184
    %v194 = vshrl.u32 2102212464, %v185
    %v195 = vor.u32 %v193, %v194
    %v196 = vshll.u32 2102212464, %v184
    %v197 = vshrl.u32 920167782, %v185
    %v198 = vor.u32 %v196, %v197
    %v199 = vshll.u32 920167782, %v184
    %v200 = vshrl.u32 1326507024, %v185
    %v201 = vor.u32 %v199, %v200
    %vm202 = vcmp.lt.s32.totalorder %v183, 1
    %vm203 = vcmp.lt.s32.totalorder %v183, 2
    %vm204 = vcmp.lt.s32.totalorder %v183, 3
    %vm205 = vcmp.lt.s32.totalorder %v183, 4
    %v206 = vsel %vm202, %v186, %v189
    %v207 = vsel %vm205, %v195, 2102212464
    %v208 = vsel %vm204, %v192, %v207
    %v209 = vsel %vm203, %v206, %v208
    %v210 = vsel %vm202, %v189, %v192
    %v211 = vsel %vm205, %v198, 920167782
    %v212 = vsel %vm204, %v195, %v211
    %v213 = vsel %vm203, %v210, %v212
    %v214 = vsel %vm202, %v192, %v195
    %v215 = vsel %vm205, %v201, 1326507024
    %v216 = vsel %vm204, %v198, %v215
    %v217 = vsel %vm203, %v214, %v216
    %v218 = vshll.u32 %v178, 8
    %v219 = vmul.u32.u64.compose %v218, %v217
    %v220 = vextract.low.u32 %v219
    %v221 = vextract.high.u32 %v219
    %v222 = vmul.u32.u64.compose %v218, %v213
    %v223 = vextract.low.u32 %v222
    %v224 = vextract.high.u32 %v222
    %v225 = vmul.u32 %v218, %v209
    %v226 = vadd.s32 %v221, %v223
    %vm227 = vc.u32 %v221, %v223
    %v228 = vadd.s32 %v224, 1
    %v229 = vsel %vm227, %v228, %v224
    %v230 = vadd.s32 %v225, %v229
    %v231 = vadd.s32 %v230, 536870912
    %v232 = vshrl.u32 %v231, 30
    %v233 = vshll.u32 %v232, 30
    %v234 = vsub.s32 %v230, %v233
    %vm235 = vcmp.lt.s32.totalorder %v234, 0
    %v236 = vsub.s32 0, %v234
    %v237 = vsel %vm235, %v236, %v234
    %v238 = vclz %v237
    %v239 = vsub.s32 %v238, 2
    %vm240 = vcmp.gt.s32.totalorder 0, %v239
    %v241 = vsel %vm240, 0, %v239
    %v242 = vsub.s32 32, %v241
    %v243 = vshll.u32 %v234, %v241
    %v244 = vshrl.u32 %v226, %v242
    %v245 = vor.u32 %v243, %v244
    %v246 = vsub.s32 4294967266, %v241
    %v247 = vadd.s32 %v246, 127
    %v248 = vshll.u32 %v247, 23
    %v249 = vor.u32 4788187, %v248
    %v250 = vand.u32 2147483647, %v249
    %v252 = vcvt.s32.f32 %v245
    %v253 = vmul.f32 %v252, %v250
    %v254 = vxor.u32 %v253, 2147483648
    %v255 = vsel %vm172, %v254, %v253
    %v256 = vsub.s32 4, %v232
    %v257 = vsel %vm172, %v256, %v232
    %v258 = vsel %vm171, %v66, %v255
    %v259 = vsel %vm171, 0, %v257
    %v260 = vcosq.f32.pop %v258
    %v261 = vsinq.f32.pop %v258
    %vm262 = vweird.f32 %v66
    %v263 = vadd.s32 %v259, 3
    %v264 = vand.u32 %v263, 3
    %vm265 = vcmp.lt.s32.totalorder %v264, 2
    %vm266 = vcmp.eq.s32.totalorder %v264, 0
    %v267 = vxor.u32 %v261, 2147483648
    %v268 = vsel %vm266, %v260, %v267
    %vm269 = vcmp.eq.s32.totalorder %v264, 2
    %v270 = vxor.u32 %v260, 2147483648
    %v271 = vsel %vm269, %v270, %v261
    %v272 = vsel %vm265, %v268, %v271
    %v273 = vsel %vm262, nan, %v272
    %v274 = vpack.c.bf16 %v169, %v169
    %v275 = vpack.c.bf16 %v273, %v273
    %v276 = vld [vmem:[#allocation2] sm:$0xf]
    %v277 = vld [vmem:[#allocation2 + $0x4] sm:$0xf]
    %v278 = vld [vmem:[#allocation2 + $0x8] sm:$0xf]
    %v279 = vld [vmem:[#allocation2 + $0xc] sm:$0xf]
    %v280 = vld [vmem:[#allocation2 + $0x10] sm:$0xf]
    %v281 = vld [vmem:[#allocation2 + $0x14] sm:$0xf]
    %v282 = vld [vmem:[#allocation2 + $0x18] sm:$0xf]
    %v283 = vld [vmem:[#allocation2 + $0x1c] sm:$0xf]
    %v284 = vld [vmem:[#allocation2 + $0x20] sm:$0xf]
    %v285 = vld [vmem:[#allocation2 + $0x24] sm:$0xf]
    %v286 = vld [vmem:[#allocation2 + $0x28] sm:$0xf]
    %v287 = vld [vmem:[#allocation2 + $0x2c] sm:$0xf]
    %v288 = vld [vmem:[#allocation2 + $0x30] sm:$0xf]
    %v289 = vld [vmem:[#allocation2 + $0x34] sm:$0xf]
    %v290 = vld [vmem:[#allocation2 + $0x38] sm:$0xf]
    %v291 = vld [vmem:[#allocation2 + $0x3c] sm:$0xf]
    %v292 = vld [vmem:[#allocation2 + $0x40] sm:$0xf]
    %v293 = vld [vmem:[#allocation2 + $0x44] sm:$0xf]
    %v294 = vld [vmem:[#allocation2 + $0x48] sm:$0xf]
    %v295 = vld [vmem:[#allocation2 + $0x4c] sm:$0xf]
    %v296 = vld [vmem:[#allocation2 + $0x50] sm:$0xf]
    %v297 = vld [vmem:[#allocation2 + $0x54] sm:$0xf]
    %v298 = vld [vmem:[#allocation2 + $0x58] sm:$0xf]
    %v299 = vld [vmem:[#allocation2 + $0x5c] sm:$0xf]
    %v300 = vld [vmem:[#allocation2 + $0x60] sm:$0xf]
    %v301 = vld [vmem:[#allocation2 + $0x64] sm:$0xf]
    %v302 = vld [vmem:[#allocation2 + $0x68] sm:$0xf]
    %v303 = vld [vmem:[#allocation2 + $0x6c] sm:$0xf]
    %v304 = vld [vmem:[#allocation2 + $0x70] sm:$0xf]
    %v305 = vld [vmem:[#allocation2 + $0x74] sm:$0xf]
    %v306 = vld [vmem:[#allocation2 + $0x78] sm:$0xf]
    %v307 = vld [vmem:[#allocation2 + $0x7c] sm:$0xf]
    %v308 = vld [vmem:[%s3] sm:$0x1]
    %v310 = vlaneseq
    %v311 = vshrl.u32 %v310, 7
    %v312 = vsub.s32 0, %v311
    %v313 = vrot.slane %v308, %v312
    %v347 = vunpack.c.l.b16 %v276
    %v348 = vunpack.c.l.b16 %v277
    %v349 = vunpack.c.l.b16 %v278
    %v350 = vunpack.c.l.b16 %v279
    %v351 = vunpack.c.l.b16 %v280
    %v352 = vunpack.c.l.b16 %v281
    %v353 = vunpack.c.l.b16 %v282
    %v354 = vunpack.c.l.b16 %v283
    %v355 = vunpack.c.l.b16 %v284
    %v356 = vunpack.c.l.b16 %v285
    %v357 = vunpack.c.l.b16 %v286
    %v358 = vunpack.c.l.b16 %v287
    %v359 = vunpack.c.l.b16 %v288
    %v360 = vunpack.c.l.b16 %v289
    %v361 = vunpack.c.l.b16 %v290
    %v362 = vunpack.c.l.b16 %v291
    %v363 = vunpack.c.l.b16 %v292
    %v364 = vunpack.c.l.b16 %v293
    %v365 = vunpack.c.l.b16 %v294
    %v366 = vunpack.c.l.b16 %v295
    %v367 = vunpack.c.l.b16 %v296
    %v368 = vunpack.c.l.b16 %v297
    %v369 = vunpack.c.l.b16 %v298
    %v370 = vunpack.c.l.b16 %v299
    %v371 = vunpack.c.l.b16 %v300
    %v372 = vunpack.c.l.b16 %v301
    %v373 = vunpack.c.l.b16 %v302
    %v374 = vunpack.c.l.b16 %v303
    %v375 = vunpack.c.l.b16 %v304
    %v376 = vunpack.c.l.b16 %v305
    %v377 = vunpack.c.l.b16 %v306
    %v378 = vunpack.c.l.b16 %v307
    %v379 = vpack.c.b16 %v348, %v347
    %v380 = vpack.c.b16 %v350, %v349
    %v381 = vpack.c.b16 %v352, %v351
    %v382 = vpack.c.b16 %v354, %v353
    %v383 = vpack.c.b16 %v356, %v355
    %v384 = vpack.c.b16 %v358, %v357
    %v385 = vpack.c.b16 %v360, %v359
    %v386 = vpack.c.b16 %v362, %v361
    %v387 = vpack.c.b16 %v364, %v363
    %v388 = vpack.c.b16 %v366, %v365
    %v389 = vpack.c.b16 %v368, %v367
    %v390 = vpack.c.b16 %v370, %v369
    %v391 = vpack.c.b16 %v372, %v371
    %v392 = vpack.c.b16 %v374, %v373
    %v393 = vpack.c.b16 %v376, %v375
    %v394 = vpack.c.b16 %v378, %v377
    %411 = vmatprep.subr.bf16.mxu0 0
    %412 = vmatpush1.bf16.msra.mxu0 %v379
    %413 = vmatprep.subr.bf16.mxu0 0
    %414 = vmatpush1.bf16.msra.mxu0 %v380
    %415 = vmatprep.subr.bf16.mxu0 0
    %416 = vmatpush1.bf16.msra.mxu0 %v381
    %417 = vmatprep.subr.bf16.mxu0 0
    %418 = vmatpush1.bf16.msra.mxu0 %v382
    %419 = vmatprep.subr.bf16.mxu0 0
    %420 = vmatpush1.bf16.msra.mxu0 %v383
    %421 = vmatprep.subr.bf16.mxu0 0
    %422 = vmatpush1.bf16.msra.mxu0 %v384
    %423 = vmatprep.subr.bf16.mxu0 0
    %424 = vmatpush1.bf16.msra.mxu0 %v385
    %425 = vmatprep.subr.bf16.mxu0 0
    %426 = vmatpush1.bf16.msra.mxu0 %v386
    %427 = vmatprep.subr.bf16.mxu0 0
    %428 = vmatpush1.bf16.msra.mxu0 %v387
    %429 = vmatprep.subr.bf16.mxu0 0
    %430 = vmatpush1.bf16.msra.mxu0 %v388
    %431 = vmatprep.subr.bf16.mxu0 0
    %432 = vmatpush1.bf16.msra.mxu0 %v389
    %433 = vmatprep.subr.bf16.mxu0 0
    %434 = vmatpush1.bf16.msra.mxu0 %v390
    %435 = vmatprep.subr.bf16.mxu0 0
    %436 = vmatpush1.bf16.msra.mxu0 %v391
    %437 = vmatprep.subr.bf16.mxu0 0
    %438 = vmatpush1.bf16.msra.mxu0 %v392
    %439 = vmatprep.subr.bf16.mxu0 0
    %440 = vmatpush1.bf16.msra.mxu0 %v393
    %441 = vmatprep.subr.bf16.mxu0 0
    %442 = vmatpush1.bf16.msra.mxu0 %v394
    %443 = vmatprep.mubr.bf16.mxu0 %v275
    %444 = vmatmul.mubr.bf16.gmra.mrb[0].mxu0 %v274
    %v445 = vpop.f32.mrb[0].mxu0
    %v446 = vadd.f32 %v313, %v445
    %v447 = vpop.f32.mrb[0].mxu0
    %v448 = vpop.f32.mrb[0].mxu0
    %v449 = vpop.f32.mrb[0].mxu0
    %450 = vdwg.mxu0
    %v451 = vsub.f32 0.0, %v446
    %v452 = vmul.f32 %v451, 1.442695
    %v453 = vpow.pop %v452
    %v454 = vadd.f32 %v453, 1.0
    %v455 = vrcp.pop %v454
    %v456 = vmul.f32 %v446, %v455
    %v457 = vpack.c.bf16 %v456, %v456
    %v458 = vld [vmem:[#allocation5] sm:$0xf]
    %v459 = vld [vmem:[#allocation5 + $0x4] sm:$0xf]
    %v460 = vld [vmem:[#allocation5 + $0x8] sm:$0xf]
    %v461 = vld [vmem:[#allocation5 + $0xc] sm:$0xf]
    %v462 = vld [vmem:[#allocation5 + $0x10] sm:$0xf]
    %v463 = vld [vmem:[#allocation5 + $0x14] sm:$0xf]
    %v464 = vld [vmem:[#allocation5 + $0x18] sm:$0xf]
    %v465 = vld [vmem:[#allocation5 + $0x1c] sm:$0xf]
    %v466 = vld [vmem:[#allocation5 + $0x20] sm:$0xf]
    %v467 = vld [vmem:[#allocation5 + $0x24] sm:$0xf]
    %v468 = vld [vmem:[#allocation5 + $0x28] sm:$0xf]
    %v469 = vld [vmem:[#allocation5 + $0x2c] sm:$0xf]
    %v470 = vld [vmem:[#allocation5 + $0x30] sm:$0xf]
    %v471 = vld [vmem:[#allocation5 + $0x34] sm:$0xf]
    %v472 = vld [vmem:[#allocation5 + $0x38] sm:$0xf]
    %v473 = vld [vmem:[#allocation5 + $0x3c] sm:$0xf]
    %v474 = vld [vmem:[%s5] sm:$0x1]
    %v476 = vlaneseq
    %v477 = vshrl.u32 %v476, 7
    %v478 = vsub.s32 0, %v477
    %v479 = vrot.slane %v474, %v478
    %v497 = vunpack.c.l.b16 %v458
    %v498 = vunpack.c.l.b16 %v459
    %v499 = vunpack.c.l.b16 %v460
    %v500 = vunpack.c.l.b16 %v461
    %v501 = vunpack.c.l.b16 %v462
    %v502 = vunpack.c.l.b16 %v463
    %v503 = vunpack.c.l.b16 %v464
    %v504 = vunpack.c.l.b16 %v465
    %v505 = vunpack.c.l.b16 %v466
    %v506 = vunpack.c.l.b16 %v467
    %v507 = vunpack.c.l.b16 %v468
    %v508 = vunpack.c.l.b16 %v469
    %v509 = vunpack.c.l.b16 %v470
    %v510 = vunpack.c.l.b16 %v471
    %v511 = vunpack.c.l.b16 %v472
    %v512 = vunpack.c.l.b16 %v473
    %v513 = vpack.c.b16 %v498, %v497
    %v514 = vpack.c.b16 %v500, %v499
    %v515 = vpack.c.b16 %v502, %v501
    %v516 = vpack.c.b16 %v504, %v503
    %v517 = vpack.c.b16 %v506, %v505
    %v518 = vpack.c.b16 %v508, %v507
    %v519 = vpack.c.b16 %v510, %v509
    %v520 = vpack.c.b16 %v512, %v511
    %529 = vmatprep.subr.bf16.mxu0 0
    %530 = vmatpush1.bf16.msra.mxu0 %v513
    %531 = vmatprep.subr.bf16.mxu0 0
    %532 = vmatpush1.bf16.msra.mxu0 %v514
    %533 = vmatprep.subr.bf16.mxu0 0
    %534 = vmatpush1.bf16.msra.mxu0 %v515
    %535 = vmatprep.subr.bf16.mxu0 0
    %536 = vmatpush1.bf16.msra.mxu0 %v516
    %537 = vmatprep.subr.bf16.mxu0 0
    %538 = vmatpush1.bf16.msra.mxu0 %v517
    %539 = vmatprep.subr.bf16.mxu0 0
    %540 = vmatpush1.bf16.msra.mxu0 %v518
    %541 = vmatprep.subr.bf16.mxu0 0
    %542 = vmatpush1.bf16.msra.mxu0 %v519
    %543 = vmatprep.subr.bf16.mxu0 0
    %544 = vmatpush1.bf16.msra.mxu0 %v520
    %545 = vmatprep.subr.bf16.mxu0 0
    %546 = vmatpush1.bf16.msra.mxu0 0
    %547 = vmatprep.subr.bf16.mxu0 0
    %548 = vmatpush1.bf16.msra.mxu0 0
    %549 = vmatprep.subr.bf16.mxu0 0
    %550 = vmatpush1.bf16.msra.mxu0 0
    %551 = vmatprep.subr.bf16.mxu0 0
    %552 = vmatpush1.bf16.msra.mxu0 0
    %553 = vmatprep.subr.bf16.mxu0 0
    %554 = vmatpush1.bf16.msra.mxu0 0
    %555 = vmatprep.subr.bf16.mxu0 0
    %556 = vmatpush1.bf16.msra.mxu0 0
    %557 = vmatprep.subr.bf16.mxu0 0
    %558 = vmatpush1.bf16.msra.mxu0 0
    %559 = vmatprep.subr.bf16.mxu0 0
    %560 = vmatpush1.bf16.msra.mxu0 0
    %561 = vmatprep.mubr.bf16.mxu0 0
    %562 = vmatmul.mubr.bf16.gmra.mrb[0].mxu0 %v457
    %v563 = vpop.f32.mrb[0].mxu0
    %v564 = vadd.f32 %v479, %v563
    %v565 = vpop.f32.mrb[0].mxu0
    %v566 = vpop.f32.mrb[0].mxu0
    %v567 = vpop.f32.mrb[0].mxu0
    %568 = vdwg.mxu0
    %569 = vst [vmem:[#allocation7] sm:$0xff] %v564
    // Predicated region
    $region34: #{tpu_custom_call.1} parent=1 // pred_check
      _
    $region35: #{tpu_custom_call.1} parent=1 // pred_check_branch
      %571 = sbr.rel (0) target = $region37
    $region36: #{tpu_custom_call.1} parent=1 // pred_region
      %s573 = ssub.s32 128, 128
      %574 = vsyncadd [#allocation4], %s573
      %s576 = sshll.u32 [#allocation7], 4
      %s577 = int_to_ptr.vmem [resolvable:$true] %s576
      %579 = dma.vmem_to_hbm [thread:$0]  %s577, 128, %s6, [#allocation4]
    $region37: #{tpu_custom_call.1} parent=1 // pred_fallthru
      _
    // Predicated region
    $region38: #{tpu_custom_call.1} parent=1 // pred_check
      _
    $region39: #{tpu_custom_call.1} parent=1 // pred_check_branch
      %581 = sbr.rel (0) target = $region41
    $region40: #{tpu_custom_call.1} parent=1 // pred_region
      %582 = dma.done [#allocation4], 128
    $region41: #{tpu_custom_call.1} parent=1 // pred_fallthru
      _
    %583 = vsyncpa [#allocation3], 1
    %584 = vsyncpa [#allocation6], 1
    %585 = vsyncpa [#allocation4], 1

</llo_original>
